<compile_context>
chip_gen: v6e
topology: v6e:2x2x1
jax: 0.10.0
libtpu: 0.0.40
codegen_flags: <defaults>
</compile_context>

<pallas_src>
import functools

import jax
import jax.numpy as jnp
from jax.experimental import pallas as pl
from jax.experimental.pallas import tpu as pltpu


def _round_up(n: int, m: int) -> int:
    return ((n + m - 1) // m) * m


def _cdiv(a: int, b: int) -> int:
    return (a + b - 1) // b


def _sublane_multiple(dtype) -> int:
    # Sub-32-bit dtypes pack rows along sublanes: f32 -> 8, bf16 -> 16, int8 -> 32.
    bits = jnp.dtype(dtype).itemsize * 8
    return max(8, 256 // bits)


def _physical_vmem_bytes() -> int:
    try:
        info = pltpu.get_tpu_info()
        return int(getattr(info, "vmem_capacity_bytes", 64 << 20))
    except Exception:
        return 64 << 20  # conservative (v7x per-TC VMEM)


def _pick_block_batch(batch: int, sublane_mult: int,
                      max_tile: int = 512, min_blocks: int = 2) -> int:
    """Batch tile: >=2 grid blocks when the batch allows (v7x 2-TC sharding),
    <=max_tile rows (v5e/v6e roofline sweet spot), sublane-aligned, and sized to
    minimize batch-padding waste for ragged batches."""
    b_min = _round_up(batch, sublane_mult)
    if batch <= min_blocks * sublane_mult:
        return min(b_min, max_tile)
    n_blocks = max(min_blocks, _cdiv(batch, max_tile))
    return min(_round_up(_cdiv(batch, n_blocks), sublane_mult), max_tile)


# ---------------------------------------------------------------------------
# Fused path: all layers in one pallas_call, weights VMEM-resident.
# ---------------------------------------------------------------------------

def _mlp_fused_kernel(*refs, num_layers: int):
    """refs: x [tb, Din_pad], w_i [Din_pad_i, Dout_pad_i], b_i [1, Dout_pad_i],
    out [tb, Dout_pad_last]."""
    x_ref = refs[0]
    w_refs = refs[1:1 + num_layers]
    b_refs = refs[1 + num_layers:1 + 2 * num_layers]
    o_ref = refs[1 + 2 * num_layers]

    act_dtype = x_ref.dtype
    x = x_ref[...]
    for i in range(num_layers):
        # MXU matmul, f32 accumulation; bias + ReLU epilogue in f32.
        y = jnp.dot(x, w_refs[i][...], preferred_element_type=jnp.float32)
        y = y + b_refs[i][...].astype(jnp.float32)
        if i < num_layers - 1:
            x = jnp.maximum(y, 0.0).astype(act_dtype)  # activation stays on-chip
        else:
            o_ref[...] = y.astype(o_ref.dtype)


def _mlp_forward_fused(x, weights_pad, biases_pad, out_dim, block_batch, vmem_phys):
    num_layers = len(weights_pad)
    batch, d_in = x.shape
    din_pad0 = weights_pad[0].shape[0]
    dout_pad_last = weights_pad[-1].shape[1]
    itemsize = jnp.dtype(x.dtype).itemsize

    # Skip the HBM-round-trip pad when the input is already aligned.
    if d_in == din_pad0 and batch % block_batch == 0:
        x_pad, b_pad_total = x, batch
    else:
        b_pad_total = _round_up(batch, block_batch)
        x_pad = jnp.zeros((b_pad_total, din_pad0), x.dtype).at[:batch, :d_in].set(x)
    num_blocks = b_pad_total // block_batch

    # Explicit scoped-VMEM budget: single-buffered weights/biases, double-buffered
    # x/out tiles, f32 per-layer temporaries, plus margin; capped at physical VMEM.
    w_bytes = sum(int(w.size) * w.dtype.itemsize for w in weights_pad)
    b_bytes = sum(int(b.size) * b.dtype.itemsize for b in biases_pad)
    io_bytes = 2 * block_batch * (din_pad0 + dout_pad_last) * itemsize
    max_dout = max(w.shape[1] for w in weights_pad)
    tmp_bytes = 2 * block_batch * max_dout * 4
    need = int(1.2 * (w_bytes + b_bytes + io_bytes + tmp_bytes)) + (4 << 20)
    vmem_limit = int(min(vmem_phys, max(need, 32 << 20)))

    kernel = functools.partial(_mlp_fused_kernel, num_layers=num_layers)
    out_shape = jax.ShapeDtypeStruct((b_pad_total, dout_pad_last), x.dtype)

    def _run(single_buffer_resident: bool):
        pipe = {"pipeline_mode": pl.Buffered(1)} if single_buffer_resident else {}
        in_specs = [pl.BlockSpec((block_batch, din_pad0), lambda i: (i, 0))]
        for w in weights_pad:
            in_specs.append(pl.BlockSpec(w.shape, lambda i: (0, 0), **pipe))
        for b in biases_pad:
            in_specs.append(pl.BlockSpec(b.shape, lambda i: (0, 0), **pipe))
        out_specs = pl.BlockSpec((block_batch, dout_pad_last), lambda i: (i, 0))
        return pl.pallas_call(
            kernel,
            out_shape=out_shape,
            grid=(num_blocks,),
            in_specs=in_specs,
            out_specs=out_specs,
            compiler_params=pltpu.CompilerParams(
                dimension_semantics=("parallel",),   # shard batch tiles over TCs
                vmem_limit_bytes=vmem_limit,
            ),
        )(x_pad, *weights_pad, *biases_pad)

    try:
        out_pad = _run(True)
    except Exception:
        # Safety net if single-buffered resident blocks are rejected.
        out_pad = _run(False)

    if b_pad_total == batch and dout_pad_last == out_dim:
        return out_pad
    return out_pad[:batch, :out_dim]


# ---------------------------------------------------------------------------
# Tiled fallback: per-layer K/N-tiled matmul with f32 accumulator (used when
# the resident weights would not fit comfortably in VMEM, e.g. v7x 64 MiB).
# ---------------------------------------------------------------------------

def _linear_tiled_kernel(x_ref, w_ref, b_ref, o_ref, acc_ref, *, apply_relu: bool):
    k = pl.program_id(2)

    @pl.when(k == 0)
    def _():
        acc_ref[...] = jnp.zeros_like(acc_ref)

    acc_ref[...] += jnp.dot(x_ref[...], w_ref[...],
                            preferred_element_type=jnp.float32)

    @pl.when(k == pl.num_programs(2) - 1)
    def _():
        y = acc_ref[...] + b_ref[...].astype(jnp.float32)
        if apply_relu:
            y = jnp.maximum(y, 0.0)
        o_ref[...] = y.astype(o_ref.dtype)


def _linear_layer_tiled(x_pad, w_pad, b_pad, *, apply_relu, block_m, vmem_phys):
    M, K = x_pad.shape
    _, N = w_pad.shape
    tm = block_m
    tn = 256 if N % 256 == 0 else 128
    tk = 512 if K % 512 == 0 else (256 if K % 256 == 0 else 128)
    grid = (M // tm, N // tn, K // tk)

    itemsize = jnp.dtype(x_pad.dtype).itemsize
    need = (2 * (tm * tk + tk * tn + tn) * itemsize
            + 2 * tm * tn * itemsize + tm * tn * 4 + (4 << 20))
    vmem_limit = int(min(vmem_phys, max(need, 32 << 20)))

    return pl.pallas_call(
        functools.partial(_linear_tiled_kernel, apply_relu=apply_relu),
        out_shape=jax.ShapeDtypeStruct((M, N), x_pad.dtype),
        grid=grid,
        in_specs=[
            pl.BlockSpec((tm, tk), lambda i, j, k: (i, k)),
            pl.BlockSpec((tk, tn), lambda i, j, k: (k, j)),
            pl.BlockSpec((1, tn), lambda i, j, k: (0, j)),
        ],
        out_specs=pl.BlockSpec((tm, tn), lambda i, j, k: (i, j)),
        scratch_shapes=[pltpu.VMEM((tm, tn), jnp.float32)],
        compiler_params=pltpu.CompilerParams(
            dimension_semantics=("parallel", "parallel", "arbitrary"),
            vmem_limit_bytes=vmem_limit,
        ),
    )(x_pad, w_pad, b_pad)


def _mlp_forward_tiled(x, weights_pad, biases_pad, out_dim, block_m, vmem_phys):
    num_layers = len(weights_pad)
    batch, d_in = x.shape
    din_pad0 = weights_pad[0].shape[0]
    dout_pad_last = weights_pad[-1].shape[1]

    m_pad = _round_up(batch, block_m)
    if d_in == din_pad0 and m_pad == batch:
        x_cur = x
    else:
        x_cur = jnp.zeros((m_pad, din_pad0), x.dtype).at[:batch, :d_in].set(x)

    for i in range(num_layers):
        x_cur = _linear_layer_tiled(
            x_cur, weights_pad[i], biases_pad[i],
            apply_relu=(i < num_layers - 1), block_m=block_m, vmem_phys=vmem_phys)

    if m_pad == batch and dout_pad_last == out_dim:
        return x_cur
    return x_cur[:batch, :out_dim]


# ---------------------------------------------------------------------------
# Top-level dispatch + module wrapper.
# ---------------------------------------------------------------------------

def mlp_forward(x, weights_pad, biases_pad, out_dim, *,
                block_batch=None, force_tiled=False):
    vmem_phys = _physical_vmem_bytes()
    sub = _sublane_multiple(x.dtype)
    batch = x.shape[0]
    if block_batch is None:
        block_batch = _pick_block_batch(batch, sub)
    else:
        block_batch = _round_up(block_batch, sub)

    w_bytes = sum(int(w.size) * w.dtype.itemsize for w in weights_pad)
    b_bytes = sum(int(b.size) * b.dtype.itemsize for b in biases_pad)
    resident_budget = vmem_phys // 2  # leave headroom for tiles / temps / spills

    if force_tiled or (w_bytes + b_bytes) > resident_budget:
        return _mlp_forward_tiled(x, weights_pad, biases_pad, out_dim,
                                  block_batch, vmem_phys)
    return _mlp_forward_fused(x, weights_pad, biases_pad, out_dim,
                              block_batch, vmem_phys)


class MultiLayerPerceptronPallas:
    """JAX/Pallas port of the PyTorch MultiLayerPerceptron.

    layers[i]: Linear(input_dim if i == 0 else hidden_dim,
                      hidden_dim if i < num_layers - 1 else output_dim)
    forward: ReLU after every layer except the last.
    """

    def __init__(self, input_dim, hidden_dim, output_dim, num_layers, key,
                 param_dtype=jnp.bfloat16):
        self.num_layers = num_layers
        self.output_dim = output_dim
        self.param_dtype = jnp.dtype(param_dtype)

        dims_in = [input_dim] + [hidden_dim] * (num_layers - 1)
        dims_out = [hidden_dim] * (num_layers - 1) + [output_dim]

        self.params = []        # unpadded (W.T [Din, Dout], b [Dout]) for reference
        self.weights_pad = []   # padded W.T [Din_pad, Dout_pad] for the kernel
        self.biases_pad = []    # padded b   [1, Dout_pad]       for the kernel

        for i in range(num_layers):
            key, kw, kb = jax.random.split(key, 3)
            d_in, d_out = dims_in[i], dims_out[i]
            # Deterministic init (Kaiming-uniform-like bound, as in nn.Linear).
            bound = 1.0 / float(d_in) ** 0.5
            w = jax.random.uniform(kw, (d_out, d_in), jnp.float32, -bound, bound)
            b = jax.random.uniform(kb, (d_out,), jnp.float32, -bound, bound)

            w_t = jnp.transpose(w).astype(self.param_dtype)   # [Din, Dout]
            b = b.astype(self.param_dtype)
            self.params.append((w_t, b))

            din_pad = _round_up(d_in, 128)
            dout_pad = _round_up(d_out, 128)
            w_pad = (jnp.zeros((din_pad, dout_pad), self.param_dtype)
                     .at[:d_in, :d_out].set(w_t))
            b_pad = jnp.zeros((1, dout_pad), self.param_dtype).at[0, :d_out].set(b)
            self.weights_pad.append(w_pad)
            self.biases_pad.append(b_pad)

    def __call__(self, x, *, block_batch=None, force_tiled=False):
        x = x.astype(self.param_dtype)
        return mlp_forward(x, self.weights_pad, self.biases_pad, self.output_dim,
                           block_batch=block_batch, force_tiled=force_tiled)

    def reference(self, x):
        """Pure-JAX reference mirroring the kernel's mixed-precision math."""
        x = x.astype(self.param_dtype)
        for i, (w_t, b) in enumerate(self.params):
            y = jnp.dot(x, w_t, preferred_element_type=jnp.float32)
            y = y + b.astype(jnp.float32)
            if i < self.num_layers - 1:
                x = jnp.maximum(y, 0.0).astype(self.param_dtype)
            else:
                return y.astype(self.param_dtype)


if __name__ == "__main__":
    key = jax.random.PRNGKey(0)
    k_model, k_x = jax.random.split(key)

    input_dim, hidden_dim, output_dim, num_layers = 16, 32, 8, 3
    batch = 8
    x = jax.random.normal(k_x, (batch, input_dim), jnp.float32)

    # f32 parameters: fused path, tight tolerance vs. pure-JAX reference.
    mlp_f32 = MultiLayerPerceptronPallas(input_dim, hidden_dim, output_dim,
                                         num_layers, k_model,
                                         param_dtype=jnp.float32)
    out = jax.block_until_ready(mlp_f32(x))
    ref = jax.block_until_ready(mlp_f32.reference(x))
    assert out.shape == (batch, output_dim), out.shape
    assert jnp.allclose(out, ref, atol=1e-5, rtol=1e-5), "f32 fused mismatch"

    # bf16 parameters (MXU-native dtype): fused path vs. matching mixed-precision
    # reference (f32 accumulation, bf16 storage), looser tolerance for bf16 rounding.
    mlp_bf16 = MultiLayerPerceptronPallas(input_dim, hidden_dim, output_dim,
                                          num_layers, k_model,
                                          param_dtype=jnp.bfloat16)
    out_bf = jax.block_until_ready(mlp_bf16(x))
    ref_bf = jax.block_until_ready(mlp_bf16.reference(x))
    assert out_bf.shape == (batch, output_dim), out_bf.shape
    assert jnp.allclose(out_bf.astype(jnp.float32), ref_bf.astype(jnp.float32),
                        atol=2e-2, rtol=2e-2), "bf16 fused mismatch"

    # Force the K/N-tiled per-layer fallback (used automatically for large
    # weights that don't fit VMEM, e.g. on v7x) and check it too.
    out_tiled = jax.block_until_ready(mlp_f32(x, force_tiled=True))
    assert jnp.allclose(out_tiled, ref, atol=1e-5, rtol=1e-5), "tiled mismatch"

    print("KERNEL_OK")
</pallas_src>

<mosaic_0001>
module attributes {stable_mosaic.version = 11 : i64} {
  func.func @_mlp_fused_kernel(%arg0: i32, %arg1: memref<8x128xf32, #tpu.memory_space<vmem>>, %arg2: memref<128x128xf32, #tpu.memory_space<vmem>>, %arg3: memref<128x128xf32, #tpu.memory_space<vmem>>, %arg4: memref<128x128xf32, #tpu.memory_space<vmem>>, %arg5: memref<1x128xf32, #tpu.memory_space<vmem>>, %arg6: memref<1x128xf32, #tpu.memory_space<vmem>>, %arg7: memref<1x128xf32, #tpu.memory_space<vmem>>, %arg8: memref<8x128xf32, #tpu.memory_space<vmem>>) attributes {dimension_semantics = [#tpu.dimension_semantics<parallel>], iteration_bounds = array<i64: 1>, scalar_prefetch = 0 : i64, scratch_operands = 0 : i64, tpu.core_type = #tpu.core_type<tc>, window_params = [{transform_indices = @transform_0, window_bounds = array<i64: 8, 128>}, {pipeline_mode = #tpu.pipeline_mode<synchronous>, transform_indices = @transform_1, window_bounds = array<i64: 128, 128>}, {pipeline_mode = #tpu.pipeline_mode<synchronous>, transform_indices = @transform_2, window_bounds = array<i64: 128, 128>}, {pipeline_mode = #tpu.pipeline_mode<synchronous>, transform_indices = @transform_3, window_bounds = array<i64: 128, 128>}, {pipeline_mode = #tpu.pipeline_mode<synchronous>, transform_indices = @transform_4, window_bounds = array<i64: 1, 128>}, {pipeline_mode = #tpu.pipeline_mode<synchronous>, transform_indices = @transform_5, window_bounds = array<i64: 1, 128>}, {pipeline_mode = #tpu.pipeline_mode<synchronous>, transform_indices = @transform_6, window_bounds = array<i64: 1, 128>}, {transform_indices = @transform_7, window_bounds = array<i64: 8, 128>}]} {
    %c0 = arith.constant 0 : index
    %c0_0 = arith.constant 0 : index
    %0 = vector.load %arg1[%c0, %c0_0] : memref<8x128xf32, #tpu.memory_space<vmem>>, vector<8x128xf32>
    %c0_1 = arith.constant 0 : index
    %c0_2 = arith.constant 0 : index
    %1 = vector.load %arg2[%c0_1, %c0_2] : memref<128x128xf32, #tpu.memory_space<vmem>>, vector<128x128xf32>
    %cst = arith.constant dense<0.000000e+00> : vector<8x128xf32>
    %2 = tpu.matmul %0, %1, %cst {dimension_numbers = #tpu.dot_dimension_numbers<[1], [0], [0], [1], [0, 0, 1, 1], [], []>} : vector<8x128xf32>, vector<128x128xf32>, vector<8x128xf32> -> vector<8x128xf32>
    %c0_3 = arith.constant 0 : index
    %c0_4 = arith.constant 0 : index
    %3 = vector.load %arg5[%c0_3, %c0_4] : memref<1x128xf32, #tpu.memory_space<vmem>>, vector<1x128xf32>
    %4 = vector.broadcast %3 : vector<1x128xf32> to vector<8x128xf32>
    %5 = arith.addf %2, %4 : vector<8x128xf32>
    %cst_5 = arith.constant 0.000000e+00 : f32
    %6 = vector.broadcast %cst_5 : f32 to vector<8x128xf32>
    %7 = arith.maximumf %5, %6 : vector<8x128xf32>
    %c0_6 = arith.constant 0 : index
    %c0_7 = arith.constant 0 : index
    %8 = vector.load %arg3[%c0_6, %c0_7] : memref<128x128xf32, #tpu.memory_space<vmem>>, vector<128x128xf32>
    %cst_8 = arith.constant dense<0.000000e+00> : vector<8x128xf32>
    %9 = tpu.matmul %7, %8, %cst_8 {dimension_numbers = #tpu.dot_dimension_numbers<[1], [0], [0], [1], [0, 0, 1, 1], [], []>} : vector<8x128xf32>, vector<128x128xf32>, vector<8x128xf32> -> vector<8x128xf32>
    %c0_9 = arith.constant 0 : index
    %c0_10 = arith.constant 0 : index
    %10 = vector.load %arg6[%c0_9, %c0_10] : memref<1x128xf32, #tpu.memory_space<vmem>>, vector<1x128xf32>
    %11 = vector.broadcast %10 : vector<1x128xf32> to vector<8x128xf32>
    %12 = arith.addf %9, %11 : vector<8x128xf32>
    %cst_11 = arith.constant 0.000000e+00 : f32
    %13 = vector.broadcast %cst_11 : f32 to vector<8x128xf32>
    %14 = arith.maximumf %12, %13 : vector<8x128xf32>
    %c0_12 = arith.constant 0 : index
    %c0_13 = arith.constant 0 : index
    %15 = vector.load %arg4[%c0_12, %c0_13] : memref<128x128xf32, #tpu.memory_space<vmem>>, vector<128x128xf32>
    %cst_14 = arith.constant dense<0.000000e+00> : vector<8x128xf32>
    %16 = tpu.matmul %14, %15, %cst_14 {dimension_numbers = #tpu.dot_dimension_numbers<[1], [0], [0], [1], [0, 0, 1, 1], [], []>} : vector<8x128xf32>, vector<128x128xf32>, vector<8x128xf32> -> vector<8x128xf32>
    %c0_15 = arith.constant 0 : index
    %c0_16 = arith.constant 0 : index
    %17 = vector.load %arg7[%c0_15, %c0_16] : memref<1x128xf32, #tpu.memory_space<vmem>>, vector<1x128xf32>
    %18 = vector.broadcast %17 : vector<1x128xf32> to vector<8x128xf32>
    %19 = arith.addf %16, %18 : vector<8x128xf32>
    %c0_17 = arith.constant 0 : index
    %c0_18 = arith.constant 0 : index
    %20 = vector.load %arg8[%c0_17, %c0_18] : memref<8x128xf32, #tpu.memory_space<vmem>>, vector<8x128xf32>
    tpu.vector_store %arg8[%c0_17, %c0_18], %19 {strides = array<i32>} : memref<8x128xf32, #tpu.memory_space<vmem>>, vector<8x128xf32>,
    return
  }
  func.func @transform_0(%arg0: i32) -> (i32, i32) {
    %c0_i32 = arith.constant 0 : i32
    %c0_i32_0 = arith.constant 0 : i32
    return %arg0, %c0_i32 : i32, i32
  }
  func.func @transform_1(%arg0: i32) -> (i32, i32) {
    %c0_i32 = arith.constant 0 : i32
    %c0_i32_0 = arith.constant 0 : i32
    %c0_i32_1 = arith.constant 0 : i32
    return %c0_i32, %c0_i32_0 : i32, i32
  }
  func.func @transform_2(%arg0: i32) -> (i32, i32) {
    %c0_i32 = arith.constant 0 : i32
    %c0_i32_0 = arith.constant 0 : i32
    %c0_i32_1 = arith.constant 0 : i32
    return %c0_i32, %c0_i32_0 : i32, i32
  }
  func.func @transform_3(%arg0: i32) -> (i32, i32) {
    %c0_i32 = arith.constant 0 : i32
    %c0_i32_0 = arith.constant 0 : i32
    %c0_i32_1 = arith.constant 0 : i32
    return %c0_i32, %c0_i32_0 : i32, i32
  }
  func.func @transform_4(%arg0: i32) -> (i32, i32) {
    %c0_i32 = arith.constant 0 : i32
    %c0_i32_0 = arith.constant 0 : i32
    %c0_i32_1 = arith.constant 0 : i32
    return %c0_i32, %c0_i32_0 : i32, i32
  }
  func.func @transform_5(%arg0: i32) -> (i32, i32) {
    %c0_i32 = arith.constant 0 : i32
    %c0_i32_0 = arith.constant 0 : i32
    %c0_i32_1 = arith.constant 0 : i32
    return %c0_i32, %c0_i32_0 : i32, i32
  }
  func.func @transform_6(%arg0: i32) -> (i32, i32) {
    %c0_i32 = arith.constant 0 : i32
    %c0_i32_0 = arith.constant 0 : i32
    %c0_i32_1 = arith.constant 0 : i32
    return %c0_i32, %c0_i32_0 : i32, i32
  }
  func.func @transform_7(%arg0: i32) -> (i32, i32) {
    %c0_i32 = arith.constant 0 : i32
    %c0_i32_0 = arith.constant 0 : i32
    return %arg0, %c0_i32 : i32, i32
  }
}

module attributes {stable_mosaic.version = 11 : i64} {
  func.func @_mlp_fused_kernel(%arg0: i32, %arg1: memref<8x128xf32, #tpu.memory_space<vmem>>, %arg2: memref<128x128xf32, #tpu.memory_space<vmem>>, %arg3: memref<128x128xf32, #tpu.memory_space<vmem>>, %arg4: memref<128x128xf32, #tpu.memory_space<vmem>>, %arg5: memref<1x128xf32, #tpu.memory_space<vmem>>, %arg6: memref<1x128xf32, #tpu.memory_space<vmem>>, %arg7: memref<1x128xf32, #tpu.memory_space<vmem>>, %arg8: memref<8x128xf32, #tpu.memory_space<vmem>>) attributes {dimension_semantics = [#tpu.dimension_semantics<parallel>], iteration_bounds = array<i64: 1>, scalar_prefetch = 0 : i64, scratch_operands = 0 : i64, tpu.core_type = #tpu.core_type<tc>, window_params = [{transform_indices = @transform_0, window_bounds = array<i64: 8, 128>}, {pipeline_mode = #tpu.pipeline_mode<synchronous>, transform_indices = @transform_1, window_bounds = array<i64: 128, 128>}, {pipeline_mode = #tpu.pipeline_mode<synchronous>, transform_indices = @transform_2, window_bounds = array<i64: 128, 128>}, {pipeline_mode = #tpu.pipeline_mode<synchronous>, transform_indices = @transform_3, window_bounds = array<i64: 128, 128>}, {pipeline_mode = #tpu.pipeline_mode<synchronous>, transform_indices = @transform_4, window_bounds = array<i64: 1, 128>}, {pipeline_mode = #tpu.pipeline_mode<synchronous>, transform_indices = @transform_5, window_bounds = array<i64: 1, 128>}, {pipeline_mode = #tpu.pipeline_mode<synchronous>, transform_indices = @transform_6, window_bounds = array<i64: 1, 128>}, {transform_indices = @transform_7, window_bounds = array<i64: 8, 128>}]} {
    %c0 = arith.constant 0 : index
    %c0_0 = arith.constant 0 : index
    %0 = vector.load %arg1[%c0, %c0_0] : memref<8x128xf32, #tpu.memory_space<vmem>>, vector<8x128xf32>
    %c0_1 = arith.constant 0 : index
    %c0_2 = arith.constant 0 : index
    %1 = vector.load %arg2[%c0_1, %c0_2] : memref<128x128xf32, #tpu.memory_space<vmem>>, vector<128x128xf32>
    %cst = arith.constant dense<0.000000e+00> : vector<8x128xf32>
    %2 = tpu.matmul %0, %1, %cst {dimension_numbers = #tpu.dot_dimension_numbers<[1], [0], [0], [1], [0, 0, 1, 1], [], []>} : vector<8x128xf32>, vector<128x128xf32>, vector<8x128xf32> -> vector<8x128xf32>
    %c0_3 = arith.constant 0 : index
    %c0_4 = arith.constant 0 : index
    %3 = vector.load %arg5[%c0_3, %c0_4] : memref<1x128xf32, #tpu.memory_space<vmem>>, vector<1x128xf32>
    %4 = vector.broadcast %3 : vector<1x128xf32> to vector<8x128xf32>
    %5 = arith.addf %2, %4 : vector<8x128xf32>
    %cst_5 = arith.constant 0.000000e+00 : f32
    %6 = vector.broadcast %cst_5 : f32 to vector<8x128xf32>
    %7 = arith.maximumf %5, %6 : vector<8x128xf32>
    %c0_6 = arith.constant 0 : index
    %c0_7 = arith.constant 0 : index
    %8 = vector.load %arg3[%c0_6, %c0_7] : memref<128x128xf32, #tpu.memory_space<vmem>>, vector<128x128xf32>
    %cst_8 = arith.constant dense<0.000000e+00> : vector<8x128xf32>
    %9 = tpu.matmul %7, %8, %cst_8 {dimension_numbers = #tpu.dot_dimension_numbers<[1], [0], [0], [1], [0, 0, 1, 1], [], []>} : vector<8x128xf32>, vector<128x128xf32>, vector<8x128xf32> -> vector<8x128xf32>
    %c0_9 = arith.constant 0 : index
    %c0_10 = arith.constant 0 : index
    %10 = vector.load %arg6[%c0_9, %c0_10] : memref<1x128xf32, #tpu.memory_space<vmem>>, vector<1x128xf32>
    %11 = vector.broadcast %10 : vector<1x128xf32> to vector<8x128xf32>
    %12 = arith.addf %9, %11 : vector<8x128xf32>
    %cst_11 = arith.constant 0.000000e+00 : f32
    %13 = vector.broadcast %cst_11 : f32 to vector<8x128xf32>
    %14 = arith.maximumf %12, %13 : vector<8x128xf32>
    %c0_12 = arith.constant 0 : index
    %c0_13 = arith.constant 0 : index
    %15 = vector.load %arg4[%c0_12, %c0_13] : memref<128x128xf32, #tpu.memory_space<vmem>>, vector<128x128xf32>
    %cst_14 = arith.constant dense<0.000000e+00> : vector<8x128xf32>
    %16 = tpu.matmul %14, %15, %cst_14 {dimension_numbers = #tpu.dot_dimension_numbers<[1], [0], [0], [1], [0, 0, 1, 1], [], []>} : vector<8x128xf32>, vector<128x128xf32>, vector<8x128xf32> -> vector<8x128xf32>
    %c0_15 = arith.constant 0 : index
    %c0_16 = arith.constant 0 : index
    %17 = vector.load %arg7[%c0_15, %c0_16] : memref<1x128xf32, #tpu.memory_space<vmem>>, vector<1x128xf32>
    %18 = vector.broadcast %17 : vector<1x128xf32> to vector<8x128xf32>
    %19 = arith.addf %16, %18 : vector<8x128xf32>
    %c0_17 = arith.constant 0 : index
    %c0_18 = arith.constant 0 : index
    %20 = vector.load %arg8[%c0_17, %c0_18] : memref<8x128xf32, #tpu.memory_space<vmem>>, vector<8x128xf32>
    tpu.vector_store %arg8[%c0_17, %c0_18], %19 {strides = array<i32>} : memref<8x128xf32, #tpu.memory_space<vmem>>, vector<8x128xf32>,
    return
  }
  func.func @transform_0(%arg0: i32) -> (i32, i32) {
    %c0_i32 = arith.constant 0 : i32
    %c0_i32_0 = arith.constant 0 : i32
    return %arg0, %c0_i32 : i32, i32
  }
  func.func @transform_1(%arg0: i32) -> (i32, i32) {
    %c0_i32 = arith.constant 0 : i32
    %c0_i32_0 = arith.constant 0 : i32
    %c0_i32_1 = arith.constant 0 : i32
    return %c0_i32, %c0_i32_0 : i32, i32
  }
  func.func @transform_2(%arg0: i32) -> (i32, i32) {
    %c0_i32 = arith.constant 0 : i32
    %c0_i32_0 = arith.constant 0 : i32
    %c0_i32_1 = arith.constant 0 : i32
    return %c0_i32, %c0_i32_0 : i32, i32
  }
  func.func @transform_3(%arg0: i32) -> (i32, i32) {
    %c0_i32 = arith.constant 0 : i32
    %c0_i32_0 = arith.constant 0 : i32
    %c0_i32_1 = arith.constant 0 : i32
    return %c0_i32, %c0_i32_0 : i32, i32
  }
  func.func @transform_4(%arg0: i32) -> (i32, i32) {
    %c0_i32 = arith.constant 0 : i32
    %c0_i32_0 = arith.constant 0 : i32
    %c0_i32_1 = arith.constant 0 : i32
    return %c0_i32, %c0_i32_0 : i32, i32
  }
  func.func @transform_5(%arg0: i32) -> (i32, i32) {
    %c0_i32 = arith.constant 0 : i32
    %c0_i32_0 = arith.constant 0 : i32
    %c0_i32_1 = arith.constant 0 : i32
    return %c0_i32, %c0_i32_0 : i32, i32
  }
  func.func @transform_6(%arg0: i32) -> (i32, i32) {
    %c0_i32 = arith.constant 0 : i32
    %c0_i32_0 = arith.constant 0 : i32
    %c0_i32_1 = arith.constant 0 : i32
    return %c0_i32, %c0_i32_0 : i32, i32
  }
  func.func @transform_7(%arg0: i32) -> (i32, i32) {
    %c0_i32 = arith.constant 0 : i32
    %c0_i32_0 = arith.constant 0 : i32
    return %arg0, %c0_i32 : i32, i32
  }
}

</mosaic_0001>

<llo_original>
// kernel: tpu_custom_call.1
$region0: #{tpu_custom_call.1}
  #allocation0 [shape = 'u32[]', space=smem, size = 0x4, offset = 0x4, fixed_abs, tag = 'smem constant byte address 0x4 - core index']
  #allocation1 [shape = 'u32[144,128]{1,0:T(1,128)}', space=vmem, size = 0x12000, scoped, tag = 'internal scratch']
  %s0 = inlined_call_operand.hbm [shape: f32[8,128], index: 0, kind: input, shape index: {}]
  %s1 = inlined_call_operand.hbm [shape: f32[128,128], index: 1, kind: input, shape index: {}]
  %s2 = inlined_call_operand.hbm [shape: f32[128,128], index: 2, kind: input, shape index: {}]
  %s3 = inlined_call_operand.hbm [shape: f32[128,128], index: 3, kind: input, shape index: {}]
  %s4 = inlined_call_operand.vmem [shape: f32[1,128], index: 4, kind: input, shape index: {}]
  %s5 = inlined_call_operand.vmem [shape: f32[1,128], index: 5, kind: input, shape index: {}]
  %s6 = inlined_call_operand.vmem [shape: f32[1,128], index: 6, kind: input, shape index: {}]
  %s7 = inlined_call_operand.hbm [shape: f32[8,128], index: 7, kind: output, shape index: {}]
  %s8 = sld [smem:[#allocation0]]
  $region54: #{tpu_custom_call.1} parent=0
    _
  %s10 = ssub.s32 1, %s8
  %s11 = scalar_select 0, %s10, %s8
  $region1: #{tpu_custom_call.1} parent=0
    #allocation2 [shape = 'u8[4096]{0}', space=vmem, size = 0x1000, scoped, tag = 'input window, operand 0, single buffered']
    #allocation3 [shape = 's32[1]{0}', space=sflag, size = 0x4, scoped, tag = 'scoped memory for tpu_custom_call.1']
    #allocation4 [shape = 's32[1]{0}', space=sflag, size = 0x4, scoped, tag = 'scoped memory for tpu_custom_call.1']
    #allocation5 [shape = 'u8[65536]{0}', space=vmem, size = 0x10000, scoped, tag = 'input window, operand 1, single buffered']
    #allocation6 [shape = 's32[1]{0}', space=sflag, size = 0x4, scoped, tag = 'scoped memory for tpu_custom_call.1']
    #allocation7 [shape = 'u8[65536]{0}', space=vmem, size = 0x10000, scoped, tag = 'input window, operand 2, single buffered']
    #allocation8 [shape = 'u8[65536]{0}', space=vmem, size = 0x10000, scoped, tag = 'input window, operand 3, single buffered']
    #allocation9 [shape = 's32[1]{0}', space=sflag, size = 0x4, scoped, tag = 'scoped memory for tpu_custom_call.1']
    #allocation10 [shape = 'u8[4096]{0}', space=vmem, size = 0x1000, scoped, tag = 'output window, operand 0, single buffered']
    %12 = vsyncpa [#allocation3], 0
    %13 = vsyncpa [#allocation6], 0
    %14 = vsyncpa [#allocation9], 0
    %15 = vsyncpa [#allocation4], 0
    // Predicated region
    $region2: #{tpu_custom_call.1} parent=1 // pred_check
      _
    $region3: #{tpu_custom_call.1} parent=1 // pred_check_branch
      %17 = sbr.rel (0) target = $region5
    $region4: #{tpu_custom_call.1} parent=1 // pred_region
      %s19 = ssub.s32 128, 128
      %20 = vsyncadd [#allocation3], %s19
      %s22 = sshll.u32 [#allocation2], 4
      %s23 = int_to_ptr.vmem [resolvable:$true] %s22
      %25 = dma.hbm_to_vmem [thread:$0]  %s0, 128, %s23, [#allocation3]
    $region5: #{tpu_custom_call.1} parent=1 // pred_fallthru
      _
    // Predicated region
    $region6: #{tpu_custom_call.1} parent=1 // pred_check
      _
    $region7: #{tpu_custom_call.1} parent=1 // pred_check_branch
      %27 = sbr.rel (0) target = $region9
    $region8: #{tpu_custom_call.1} parent=1 // pred_region
      %s29 = ssub.s32 2048, 2048
      %30 = vsyncadd [#allocation6], %s29
      %s31 = sshll.u32 [#allocation5], 4
      %s32 = int_to_ptr.vmem [resolvable:$true] %s31
      %37 = dma.hbm_to_vmem [thread:$0]  %s1, 2048, %s32, [#allocation6], 128, 128, 8
    $region9: #{tpu_custom_call.1} parent=1 // pred_fallthru
      _
    // Predicated region
    $region10: #{tpu_custom_call.1} parent=1 // pred_check
      _
    $region11: #{tpu_custom_call.1} parent=1 // pred_check_branch
      %39 = sbr.rel (0) target = $region13
    $region12: #{tpu_custom_call.1} parent=1 // pred_region
      %s41 = ssub.s32 2048, 2048
      %42 = vsyncadd [#allocation6], %s41
      %s43 = sshll.u32 [#allocation7], 4
      %s44 = int_to_ptr.vmem [resolvable:$true] %s43
      %49 = dma.hbm_to_vmem [thread:$0]  %s2, 2048, %s44, [#allocation6], 128, 128, 8
    $region13: #{tpu_custom_call.1} parent=1 // pred_fallthru
      _
    // Predicated region
    $region14: #{tpu_custom_call.1} parent=1 // pred_check
      _
    $region15: #{tpu_custom_call.1} parent=1 // pred_check_branch
      %51 = sbr.rel (0) target = $region17
    $region16: #{tpu_custom_call.1} parent=1 // pred_region
      %s53 = ssub.s32 2048, 2048
      %54 = vsyncadd [#allocation9], %s53
      %s55 = sshll.u32 [#allocation8], 4
      %s56 = int_to_ptr.vmem [resolvable:$true] %s55
      %61 = dma.hbm_to_vmem [thread:$0]  %s3, 2048, %s56, [#allocation9], 128, 128, 8
    $region17: #{tpu_custom_call.1} parent=1 // pred_fallthru
      _
    // Predicated region
    $region18: #{tpu_custom_call.1} parent=1 // pred_check
      _
    $region19: #{tpu_custom_call.1} parent=1 // pred_check_branch
      %63 = sbr.rel (0) target = $region21
    $region20: #{tpu_custom_call.1} parent=1 // pred_region
      _
    $region21: #{tpu_custom_call.1} parent=1 // pred_fallthru
      _
    // Predicated region
    $region22: #{tpu_custom_call.1} parent=1 // pred_check
      _
    $region23: #{tpu_custom_call.1} parent=1 // pred_check_branch
      %65 = sbr.rel (0) target = $region25
    $region24: #{tpu_custom_call.1} parent=1 // pred_region
      _
    $region25: #{tpu_custom_call.1} parent=1 // pred_fallthru
      _
    // Predicated region
    $region26: #{tpu_custom_call.1} parent=1 // pred_check
      _
    $region27: #{tpu_custom_call.1} parent=1 // pred_check_branch
      %67 = sbr.rel (0) target = $region29
    $region28: #{tpu_custom_call.1} parent=1 // pred_region
      _
    $region29: #{tpu_custom_call.1} parent=1 // pred_fallthru
      _
    // Predicated region
    $region30: #{tpu_custom_call.1} parent=1 // pred_check
      _
    $region31: #{tpu_custom_call.1} parent=1 // pred_check_branch
      %69 = sbr.rel (0) target = $region33
    $region32: #{tpu_custom_call.1} parent=1 // pred_region
      %70 = dma.done [#allocation3], 128
    $region33: #{tpu_custom_call.1} parent=1 // pred_fallthru
      _
    // Predicated region
    $region34: #{tpu_custom_call.1} parent=1 // pred_check
      _
    $region35: #{tpu_custom_call.1} parent=1 // pred_check_branch
      %72 = sbr.rel (0) target = $region37
    $region36: #{tpu_custom_call.1} parent=1 // pred_region
      %73 = dma.done [#allocation6], 2048
    $region37: #{tpu_custom_call.1} parent=1 // pred_fallthru
      _
    // Predicated region
    $region38: #{tpu_custom_call.1} parent=1 // pred_check
      _
    $region39: #{tpu_custom_call.1} parent=1 // pred_check_branch
      %75 = sbr.rel (0) target = $region41
    $region40: #{tpu_custom_call.1} parent=1 // pred_region
      %76 = dma.done [#allocation6], 2048
    $region41: #{tpu_custom_call.1} parent=1 // pred_fallthru
      _
    // Predicated region
    $region42: #{tpu_custom_call.1} parent=1 // pred_check
      _
    $region43: #{tpu_custom_call.1} parent=1 // pred_check_branch
      %78 = sbr.rel (0) target = $region45
    $region44: #{tpu_custom_call.1} parent=1 // pred_region
      %79 = dma.done [#allocation9], 2048
    $region45: #{tpu_custom_call.1} parent=1 // pred_fallthru
      _
    %v80 = vld [vmem:[#allocation2] sm:$0xff]
    %v81 = vld [vmem:[#allocation5] sm:$0xff]
    %v82 = vld [vmem:[#allocation5 + $0x8] sm:$0xff]
    %v83 = vld [vmem:[#allocation5 + $0x10] sm:$0xff]
    %v84 = vld [vmem:[#allocation5 + $0x18] sm:$0xff]
    %v85 = vld [vmem:[#allocation5 + $0x20] sm:$0xff]
    %v86 = vld [vmem:[#allocation5 + $0x28] sm:$0xff]
    %v87 = vld [vmem:[#allocation5 + $0x30] sm:$0xff]
    %v88 = vld [vmem:[#allocation5 + $0x38] sm:$0xff]
    %v89 = vld [vmem:[#allocation5 + $0x40] sm:$0xff]
    %v90 = vld [vmem:[#allocation5 + $0x48] sm:$0xff]
    %v91 = vld [vmem:[#allocation5 + $0x50] sm:$0xff]
    %v92 = vld [vmem:[#allocation5 + $0x58] sm:$0xff]
    %v93 = vld [vmem:[#allocation5 + $0x60] sm:$0xff]
    %v94 = vld [vmem:[#allocation5 + $0x68] sm:$0xff]
    %v95 = vld [vmem:[#allocation5 + $0x70] sm:$0xff]
    %v96 = vld [vmem:[#allocation5 + $0x78] sm:$0xff]
    %v97 = vld [vmem:[%s4] sm:$0x1]
    %v99 = vlaneseq
    %v100 = vshrl.u32 %v99, 7
    %v101 = vsub.s32 0, %v100
    %v102 = vrot.slane %v97, %v101
    %104 = vmatprep.subr.mxu0 0.0
    %105 = vmatpush1.msra.mxu0 %v96
    %106 = vmatprep.subr.mxu0 0.0
    %107 = vmatpush1.msra.mxu0 %v95
    %108 = vmatprep.subr.mxu0 0.0
    %109 = vmatpush1.msra.mxu0 %v94
    %110 = vmatprep.subr.mxu0 0.0
    %111 = vmatpush1.msra.mxu0 %v93
    %112 = vmatprep.subr.mxu0 0.0
    %113 = vmatpush1.msra.mxu0 %v92
    %114 = vmatprep.subr.mxu0 0.0
    %115 = vmatpush1.msra.mxu0 %v91
    %116 = vmatprep.subr.mxu0 0.0
    %117 = vmatpush1.msra.mxu0 %v90
    %118 = vmatprep.subr.mxu0 0.0
    %119 = vmatpush1.msra.mxu0 %v89
    %120 = vmatprep.subr.mxu0 0.0
    %121 = vmatpush1.msra.mxu0 %v88
    %122 = vmatprep.subr.mxu0 0.0
    %123 = vmatpush1.msra.mxu0 %v87
    %124 = vmatprep.subr.mxu0 0.0
    %125 = vmatpush1.msra.mxu0 %v86
    %126 = vmatprep.subr.mxu0 0.0
    %127 = vmatpush1.msra.mxu0 %v85
    %128 = vmatprep.subr.mxu0 0.0
    %129 = vmatpush1.msra.mxu0 %v84
    %130 = vmatprep.subr.mxu0 0.0
    %131 = vmatpush1.msra.mxu0 %v83
    %132 = vmatprep.subr.mxu0 0.0
    %133 = vmatpush1.msra.mxu0 %v82
    %134 = vmatprep.subr.mxu0 0.0
    %135 = vmatpush1.msra.mxu0 %v81
    %136 = vmatprep.subr.mxu0 0.0
    %137 = vmatpush2.msra.mxu0 0.0
    %138 = vmatprep.subr.mxu0 0.0
    %139 = vmatpush2.msra.mxu0 0.0
    %140 = vmatprep.subr.mxu0 0.0
    %141 = vmatpush2.msra.mxu0 0.0
    %142 = vmatprep.subr.mxu0 0.0
    %143 = vmatpush2.msra.mxu0 0.0
    %144 = vmatprep.subr.mxu0 0.0
    %145 = vmatpush2.msra.mxu0 0.0
    %146 = vmatprep.subr.mxu0 0.0
    %147 = vmatpush2.msra.mxu0 0.0
    %148 = vmatprep.subr.mxu0 0.0
    %149 = vmatpush2.msra.mxu0 0.0
    %150 = vmatprep.subr.mxu0 0.0
    %151 = vmatpush2.msra.mxu0 0.0
    %152 = vmatprep.subr.mxu0 0.0
    %153 = vmatpush2.msra.mxu0 0.0
    %154 = vmatprep.subr.mxu0 0.0
    %155 = vmatpush2.msra.mxu0 0.0
    %156 = vmatprep.subr.mxu0 0.0
    %157 = vmatpush2.msra.mxu0 0.0
    %158 = vmatprep.subr.mxu0 0.0
    %159 = vmatpush2.msra.mxu0 0.0
    %160 = vmatprep.subr.mxu0 0.0
    %161 = vmatpush2.msra.mxu0 0.0
    %162 = vmatprep.subr.mxu0 0.0
    %163 = vmatpush2.msra.mxu0 0.0
    %164 = vmatprep.subr.mxu0 0.0
    %165 = vmatpush2.msra.mxu0 0.0
    %166 = vmatprep.subr.mxu0 0.0
    %167 = vmatpush2.msra.mxu0 0.0
    %168 = vmatprep.mubr.f32.mxu0 0.0
    %169 = vmatmul.mubr.f32.gmra.mxu0 %v80
    %v170 = vpop.f32.mrf.mxu0
    %v171 = vadd.f32 %v102, %v170
    %v172 = vpop.f32.mrf.mxu0
    %173 = vdwg.mxu0
    %v174 = vmax.f32 %v171, 0.0
    %v175 = vld [vmem:[#allocation7] sm:$0xff]
    %v176 = vld [vmem:[#allocation7 + $0x8] sm:$0xff]
    %v177 = vld [vmem:[#allocation7 + $0x10] sm:$0xff]
    %v178 = vld [vmem:[#allocation7 + $0x18] sm:$0xff]
    %v179 = vld [vmem:[#allocation7 + $0x20] sm:$0xff]
    %v180 = vld [vmem:[#allocation7 + $0x28] sm:$0xff]
    %v181 = vld [vmem:[#allocation7 + $0x30] sm:$0xff]
    %v182 = vld [vmem:[#allocation7 + $0x38] sm:$0xff]
    %v183 = vld [vmem:[#allocation7 + $0x40] sm:$0xff]
    %v184 = vld [vmem:[#allocation7 + $0x48] sm:$0xff]
    %v185 = vld [vmem:[#allocation7 + $0x50] sm:$0xff]
    %v186 = vld [vmem:[#allocation7 + $0x58] sm:$0xff]
    %v187 = vld [vmem:[#allocation7 + $0x60] sm:$0xff]
    %v188 = vld [vmem:[#allocation7 + $0x68] sm:$0xff]
    %v189 = vld [vmem:[#allocation7 + $0x70] sm:$0xff]
    %v190 = vld [vmem:[#allocation7 + $0x78] sm:$0xff]
    %v191 = vld [vmem:[%s5] sm:$0x1]
    %v193 = vlaneseq
    %v194 = vshrl.u32 %v193, 7
    %v195 = vsub.s32 0, %v194
    %v196 = vrot.slane %v191, %v195
    %198 = vmatprep.subr.mxu0 0.0
    %199 = vmatpush1.msra.mxu0 %v190
    %200 = vmatprep.subr.mxu0 0.0
    %201 = vmatpush1.msra.mxu0 %v189
    %202 = vmatprep.subr.mxu0 0.0
    %203 = vmatpush1.msra.mxu0 %v188
    %204 = vmatprep.subr.mxu0 0.0
    %205 = vmatpush1.msra.mxu0 %v187
    %206 = vmatprep.subr.mxu0 0.0
    %207 = vmatpush1.msra.mxu0 %v186
    %208 = vmatprep.subr.mxu0 0.0
    %209 = vmatpush1.msra.mxu0 %v185
    %210 = vmatprep.subr.mxu0 0.0
    %211 = vmatpush1.msra.mxu0 %v184
    %212 = vmatprep.subr.mxu0 0.0
    %213 = vmatpush1.msra.mxu0 %v183
    %214 = vmatprep.subr.mxu0 0.0
    %215 = vmatpush1.msra.mxu0 %v182
    %216 = vmatprep.subr.mxu0 0.0
    %217 = vmatpush1.msra.mxu0 %v181
    %218 = vmatprep.subr.mxu0 0.0
    %219 = vmatpush1.msra.mxu0 %v180
    %220 = vmatprep.subr.mxu0 0.0
    %221 = vmatpush1.msra.mxu0 %v179
    %222 = vmatprep.subr.mxu0 0.0
    %223 = vmatpush1.msra.mxu0 %v178
    %224 = vmatprep.subr.mxu0 0.0
    %225 = vmatpush1.msra.mxu0 %v177
    %226 = vmatprep.subr.mxu0 0.0
    %227 = vmatpush1.msra.mxu0 %v176
    %228 = vmatprep.subr.mxu0 0.0
    %229 = vmatpush1.msra.mxu0 %v175
    %230 = vmatprep.subr.mxu0 0.0
    %231 = vmatpush2.msra.mxu0 0.0
    %232 = vmatprep.subr.mxu0 0.0
    %233 = vmatpush2.msra.mxu0 0.0
    %234 = vmatprep.subr.mxu0 0.0
    %235 = vmatpush2.msra.mxu0 0.0
    %236 = vmatprep.subr.mxu0 0.0
    %237 = vmatpush2.msra.mxu0 0.0
    %238 = vmatprep.subr.mxu0 0.0
    %239 = vmatpush2.msra.mxu0 0.0
    %240 = vmatprep.subr.mxu0 0.0
    %241 = vmatpush2.msra.mxu0 0.0
    %242 = vmatprep.subr.mxu0 0.0
    %243 = vmatpush2.msra.mxu0 0.0
    %244 = vmatprep.subr.mxu0 0.0
    %245 = vmatpush2.msra.mxu0 0.0
    %246 = vmatprep.subr.mxu0 0.0
    %247 = vmatpush2.msra.mxu0 0.0
    %248 = vmatprep.subr.mxu0 0.0
    %249 = vmatpush2.msra.mxu0 0.0
    %250 = vmatprep.subr.mxu0 0.0
    %251 = vmatpush2.msra.mxu0 0.0
    %252 = vmatprep.subr.mxu0 0.0
    %253 = vmatpush2.msra.mxu0 0.0
    %254 = vmatprep.subr.mxu0 0.0
    %255 = vmatpush2.msra.mxu0 0.0
    %256 = vmatprep.subr.mxu0 0.0
    %257 = vmatpush2.msra.mxu0 0.0
    %258 = vmatprep.subr.mxu0 0.0
    %259 = vmatpush2.msra.mxu0 0.0
    %260 = vmatprep.subr.mxu0 0.0
    %261 = vmatpush2.msra.mxu0 0.0
    %262 = vmatprep.mubr.f32.mxu0 0.0
    %263 = vmatmul.mubr.f32.gmra.mxu0 %v174
    %v264 = vpop.f32.mrf.mxu0
    %v265 = vadd.f32 %v196, %v264
    %v266 = vpop.f32.mrf.mxu0
    %267 = vdwg.mxu0
    %v268 = vmax.f32 %v265, 0.0
    %v269 = vld [vmem:[#allocation8] sm:$0xff]
    %v270 = vld [vmem:[#allocation8 + $0x8] sm:$0xff]
    %v271 = vld [vmem:[#allocation8 + $0x10] sm:$0xff]
    %v272 = vld [vmem:[#allocation8 + $0x18] sm:$0xff]
    %v273 = vld [vmem:[#allocation8 + $0x20] sm:$0xff]
    %v274 = vld [vmem:[#allocation8 + $0x28] sm:$0xff]
    %v275 = vld [vmem:[#allocation8 + $0x30] sm:$0xff]
    %v276 = vld [vmem:[#allocation8 + $0x38] sm:$0xff]
    %v277 = vld [vmem:[#allocation8 + $0x40] sm:$0xff]
    %v278 = vld [vmem:[#allocation8 + $0x48] sm:$0xff]
    %v279 = vld [vmem:[#allocation8 + $0x50] sm:$0xff]
    %v280 = vld [vmem:[#allocation8 + $0x58] sm:$0xff]
    %v281 = vld [vmem:[#allocation8 + $0x60] sm:$0xff]
    %v282 = vld [vmem:[#allocation8 + $0x68] sm:$0xff]
    %v283 = vld [vmem:[#allocation8 + $0x70] sm:$0xff]
    %v284 = vld [vmem:[#allocation8 + $0x78] sm:$0xff]
    %v285 = vld [vmem:[%s6] sm:$0x1]
    %v287 = vlaneseq
    %v288 = vshrl.u32 %v287, 7
    %v289 = vsub.s32 0, %v288
    %v290 = vrot.slane %v285, %v289
    %292 = vmatprep.subr.mxu0 0.0
    %293 = vmatpush1.msra.mxu0 %v284
    %294 = vmatprep.subr.mxu0 0.0
    %295 = vmatpush1.msra.mxu0 %v283
    %296 = vmatprep.subr.mxu0 0.0
    %297 = vmatpush1.msra.mxu0 %v282
    %298 = vmatprep.subr.mxu0 0.0
    %299 = vmatpush1.msra.mxu0 %v281
    %300 = vmatprep.subr.mxu0 0.0
    %301 = vmatpush1.msra.mxu0 %v280
    %302 = vmatprep.subr.mxu0 0.0
    %303 = vmatpush1.msra.mxu0 %v279
    %304 = vmatprep.subr.mxu0 0.0
    %305 = vmatpush1.msra.mxu0 %v278
    %306 = vmatprep.subr.mxu0 0.0
    %307 = vmatpush1.msra.mxu0 %v277
    %308 = vmatprep.subr.mxu0 0.0
    %309 = vmatpush1.msra.mxu0 %v276
    %310 = vmatprep.subr.mxu0 0.0
    %311 = vmatpush1.msra.mxu0 %v275
    %312 = vmatprep.subr.mxu0 0.0
    %313 = vmatpush1.msra.mxu0 %v274
    %314 = vmatprep.subr.mxu0 0.0
    %315 = vmatpush1.msra.mxu0 %v273
    %316 = vmatprep.subr.mxu0 0.0
    %317 = vmatpush1.msra.mxu0 %v272
    %318 = vmatprep.subr.mxu0 0.0
    %319 = vmatpush1.msra.mxu0 %v271
    %320 = vmatprep.subr.mxu0 0.0
    %321 = vmatpush1.msra.mxu0 %v270
    %322 = vmatprep.subr.mxu0 0.0
    %323 = vmatpush1.msra.mxu0 %v269
    %324 = vmatprep.subr.mxu0 0.0
    %325 = vmatpush2.msra.mxu0 0.0
    %326 = vmatprep.subr.mxu0 0.0
    %327 = vmatpush2.msra.mxu0 0.0
    %328 = vmatprep.subr.mxu0 0.0
    %329 = vmatpush2.msra.mxu0 0.0
    %330 = vmatprep.subr.mxu0 0.0
    %331 = vmatpush2.msra.mxu0 0.0
    %332 = vmatprep.subr.mxu0 0.0
    %333 = vmatpush2.msra.mxu0 0.0
    %334 = vmatprep.subr.mxu0 0.0
    %335 = vmatpush2.msra.mxu0 0.0
    %336 = vmatprep.subr.mxu0 0.0
    %337 = vmatpush2.msra.mxu0 0.0
    %338 = vmatprep.subr.mxu0 0.0
    %339 = vmatpush2.msra.mxu0 0.0
    %340 = vmatprep.subr.mxu0 0.0
    %341 = vmatpush2.msra.mxu0 0.0
    %342 = vmatprep.subr.mxu0 0.0
    %343 = vmatpush2.msra.mxu0 0.0
    %344 = vmatprep.subr.mxu0 0.0
    %345 = vmatpush2.msra.mxu0 0.0
    %346 = vmatprep.subr.mxu0 0.0
    %347 = vmatpush2.msra.mxu0 0.0
    %348 = vmatprep.subr.mxu0 0.0
    %349 = vmatpush2.msra.mxu0 0.0
    %350 = vmatprep.subr.mxu0 0.0
    %351 = vmatpush2.msra.mxu0 0.0
    %352 = vmatprep.subr.mxu0 0.0
    %353 = vmatpush2.msra.mxu0 0.0
    %354 = vmatprep.subr.mxu0 0.0
    %355 = vmatpush2.msra.mxu0 0.0
    %356 = vmatprep.mubr.f32.mxu0 0.0
    %357 = vmatmul.mubr.f32.gmra.mxu0 %v268
    %v358 = vpop.f32.mrf.mxu0
    %v359 = vadd.f32 %v290, %v358
    %v360 = vpop.f32.mrf.mxu0
    %361 = vdwg.mxu0
    %362 = vst [vmem:[#allocation10] sm:$0xff] %v359
    // Predicated region
    $region46: #{tpu_custom_call.1} parent=1 // pred_check
      _
    $region47: #{tpu_custom_call.1} parent=1 // pred_check_branch
      %364 = sbr.rel (0) target = $region49
    $region48: #{tpu_custom_call.1} parent=1 // pred_region
      %s366 = ssub.s32 128, 128
      %367 = vsyncadd [#allocation4], %s366
      %s369 = sshll.u32 [#allocation10], 4
      %s370 = int_to_ptr.vmem [resolvable:$true] %s369
      %372 = dma.vmem_to_hbm [thread:$0]  %s370, 128, %s7, [#allocation4]
    $region49: #{tpu_custom_call.1} parent=1 // pred_fallthru
      _
    // Predicated region
    $region50: #{tpu_custom_call.1} parent=1 // pred_check
      _
    $region51: #{tpu_custom_call.1} parent=1 // pred_check_branch
      %374 = sbr.rel (0) target = $region53
    $region52: #{tpu_custom_call.1} parent=1 // pred_region
      %375 = dma.done [#allocation4], 128
    $region53: #{tpu_custom_call.1} parent=1 // pred_fallthru
      _
    %376 = vsyncpa [#allocation3], 1
    %377 = vsyncpa [#allocation6], 1
    %378 = vsyncpa [#allocation9], 1
    %379 = vsyncpa [#allocation4], 1

// kernel: tpu_custom_call.1
$region0: #{tpu_custom_call.1}
  #allocation0 [shape = 'u32[]', space=smem, size = 0x4, offset = 0x4, fixed_abs, tag = 'smem constant byte address 0x4 - core index']
  #allocation1 [shape = 'u32[144,128]{1,0:T(1,128)}', space=vmem, size = 0x12000, scoped, tag = 'internal scratch']
  %s0 = inlined_call_operand.hbm [shape: f32[8,128], index: 0, kind: input, shape index: {}]
  %s1 = inlined_call_operand.hbm [shape: f32[128,128], index: 1, kind: input, shape index: {}]
  %s2 = inlined_call_operand.hbm [shape: f32[128,128], index: 2, kind: input, shape index: {}]
  %s3 = inlined_call_operand.hbm [shape: f32[128,128], index: 3, kind: input, shape index: {}]
  %s4 = inlined_call_operand.vmem [shape: f32[1,128], index: 4, kind: input, shape index: {}]
  %s5 = inlined_call_operand.vmem [shape: f32[1,128], index: 5, kind: input, shape index: {}]
  %s6 = inlined_call_operand.vmem [shape: f32[1,128], index: 6, kind: input, shape index: {}]
  %s7 = inlined_call_operand.hbm [shape: f32[8,128], index: 7, kind: output, shape index: {}]
  %s8 = sld [smem:[#allocation0]]
  $region54: #{tpu_custom_call.1} parent=0
    _
  %s10 = ssub.s32 1, %s8
  %s11 = scalar_select 0, %s10, %s8
  $region1: #{tpu_custom_call.1} parent=0
    #allocation2 [shape = 'u8[4096]{0}', space=vmem, size = 0x1000, scoped, tag = 'input window, operand 0, single buffered']
    #allocation3 [shape = 's32[1]{0}', space=sflag, size = 0x4, scoped, tag = 'scoped memory for tpu_custom_call.1']
    #allocation4 [shape = 's32[1]{0}', space=sflag, size = 0x4, scoped, tag = 'scoped memory for tpu_custom_call.1']
    #allocation5 [shape = 'u8[65536]{0}', space=vmem, size = 0x10000, scoped, tag = 'input window, operand 1, single buffered']
    #allocation6 [shape = 's32[1]{0}', space=sflag, size = 0x4, scoped, tag = 'scoped memory for tpu_custom_call.1']
    #allocation7 [shape = 'u8[65536]{0}', space=vmem, size = 0x10000, scoped, tag = 'input window, operand 2, single buffered']
    #allocation8 [shape = 'u8[65536]{0}', space=vmem, size = 0x10000, scoped, tag = 'input window, operand 3, single buffered']
    #allocation9 [shape = 's32[1]{0}', space=sflag, size = 0x4, scoped, tag = 'scoped memory for tpu_custom_call.1']
    #allocation10 [shape = 'u8[4096]{0}', space=vmem, size = 0x1000, scoped, tag = 'output window, operand 0, single buffered']
    %12 = vsyncpa [#allocation3], 0
    %13 = vsyncpa [#allocation6], 0
    %14 = vsyncpa [#allocation9], 0
    %15 = vsyncpa [#allocation4], 0
    // Predicated region
    $region2: #{tpu_custom_call.1} parent=1 // pred_check
      _
    $region3: #{tpu_custom_call.1} parent=1 // pred_check_branch
      %17 = sbr.rel (0) target = $region5
    $region4: #{tpu_custom_call.1} parent=1 // pred_region
      %s19 = ssub.s32 128, 128
      %20 = vsyncadd [#allocation3], %s19
      %s22 = sshll.u32 [#allocation2], 4
      %s23 = int_to_ptr.vmem [resolvable:$true] %s22
      %25 = dma.hbm_to_vmem [thread:$0]  %s0, 128, %s23, [#allocation3]
    $region5: #{tpu_custom_call.1} parent=1 // pred_fallthru
      _
    // Predicated region
    $region6: #{tpu_custom_call.1} parent=1 // pred_check
      _
    $region7: #{tpu_custom_call.1} parent=1 // pred_check_branch
      %27 = sbr.rel (0) target = $region9
    $region8: #{tpu_custom_call.1} parent=1 // pred_region
      %s29 = ssub.s32 2048, 2048
      %30 = vsyncadd [#allocation6], %s29
      %s31 = sshll.u32 [#allocation5], 4
      %s32 = int_to_ptr.vmem [resolvable:$true] %s31
      %37 = dma.hbm_to_vmem [thread:$0]  %s1, 2048, %s32, [#allocation6], 128, 128, 8
    $region9: #{tpu_custom_call.1} parent=1 // pred_fallthru
      _
    // Predicated region
    $region10: #{tpu_custom_call.1} parent=1 // pred_check
      _
    $region11: #{tpu_custom_call.1} parent=1 // pred_check_branch
      %39 = sbr.rel (0) target = $region13
    $region12: #{tpu_custom_call.1} parent=1 // pred_region
      %s41 = ssub.s32 2048, 2048
      %42 = vsyncadd [#allocation6], %s41
      %s43 = sshll.u32 [#allocation7], 4
      %s44 = int_to_ptr.vmem [resolvable:$true] %s43
      %49 = dma.hbm_to_vmem [thread:$0]  %s2, 2048, %s44, [#allocation6], 128, 128, 8
    $region13: #{tpu_custom_call.1} parent=1 // pred_fallthru
      _
    // Predicated region
    $region14: #{tpu_custom_call.1} parent=1 // pred_check
      _
    $region15: #{tpu_custom_call.1} parent=1 // pred_check_branch
      %51 = sbr.rel (0) target = $region17
    $region16: #{tpu_custom_call.1} parent=1 // pred_region
      %s53 = ssub.s32 2048, 2048
      %54 = vsyncadd [#allocation9], %s53
      %s55 = sshll.u32 [#allocation8], 4
      %s56 = int_to_ptr.vmem [resolvable:$true] %s55
      %61 = dma.hbm_to_vmem [thread:$0]  %s3, 2048, %s56, [#allocation9], 128, 128, 8
    $region17: #{tpu_custom_call.1} parent=1 // pred_fallthru
      _
    // Predicated region
    $region18: #{tpu_custom_call.1} parent=1 // pred_check
      _
    $region19: #{tpu_custom_call.1} parent=1 // pred_check_branch
      %63 = sbr.rel (0) target = $region21
    $region20: #{tpu_custom_call.1} parent=1 // pred_region
      _
    $region21: #{tpu_custom_call.1} parent=1 // pred_fallthru
      _
    // Predicated region
    $region22: #{tpu_custom_call.1} parent=1 // pred_check
      _
    $region23: #{tpu_custom_call.1} parent=1 // pred_check_branch
      %65 = sbr.rel (0) target = $region25
    $region24: #{tpu_custom_call.1} parent=1 // pred_region
      _
    $region25: #{tpu_custom_call.1} parent=1 // pred_fallthru
      _
    // Predicated region
    $region26: #{tpu_custom_call.1} parent=1 // pred_check
      _
    $region27: #{tpu_custom_call.1} parent=1 // pred_check_branch
      %67 = sbr.rel (0) target = $region29
    $region28: #{tpu_custom_call.1} parent=1 // pred_region
      _
    $region29: #{tpu_custom_call.1} parent=1 // pred_fallthru
      _
    // Predicated region
    $region30: #{tpu_custom_call.1} parent=1 // pred_check
      _
    $region31: #{tpu_custom_call.1} parent=1 // pred_check_branch
      %69 = sbr.rel (0) target = $region33
    $region32: #{tpu_custom_call.1} parent=1 // pred_region
      %70 = dma.done [#allocation3], 128
    $region33: #{tpu_custom_call.1} parent=1 // pred_fallthru
      _
    // Predicated region
    $region34: #{tpu_custom_call.1} parent=1 // pred_check
      _
    $region35: #{tpu_custom_call.1} parent=1 // pred_check_branch
      %72 = sbr.rel (0) target = $region37
    $region36: #{tpu_custom_call.1} parent=1 // pred_region
      %73 = dma.done [#allocation6], 2048
    $region37: #{tpu_custom_call.1} parent=1 // pred_fallthru
      _
    // Predicated region
    $region38: #{tpu_custom_call.1} parent=1 // pred_check
      _
    $region39: #{tpu_custom_call.1} parent=1 // pred_check_branch
      %75 = sbr.rel (0) target = $region41
    $region40: #{tpu_custom_call.1} parent=1 // pred_region
      %76 = dma.done [#allocation6], 2048
    $region41: #{tpu_custom_call.1} parent=1 // pred_fallthru
      _
    // Predicated region
    $region42: #{tpu_custom_call.1} parent=1 // pred_check
      _
    $region43: #{tpu_custom_call.1} parent=1 // pred_check_branch
      %78 = sbr.rel (0) target = $region45
    $region44: #{tpu_custom_call.1} parent=1 // pred_region
      %79 = dma.done [#allocation9], 2048
    $region45: #{tpu_custom_call.1} parent=1 // pred_fallthru
      _
    %v80 = vld [vmem:[#allocation2] sm:$0xff]
    %v81 = vld [vmem:[#allocation5] sm:$0xff]
    %v82 = vld [vmem:[#allocation5 + $0x8] sm:$0xff]
    %v83 = vld [vmem:[#allocation5 + $0x10] sm:$0xff]
    %v84 = vld [vmem:[#allocation5 + $0x18] sm:$0xff]
    %v85 = vld [vmem:[#allocation5 + $0x20] sm:$0xff]
    %v86 = vld [vmem:[#allocation5 + $0x28] sm:$0xff]
    %v87 = vld [vmem:[#allocation5 + $0x30] sm:$0xff]
    %v88 = vld [vmem:[#allocation5 + $0x38] sm:$0xff]
    %v89 = vld [vmem:[#allocation5 + $0x40] sm:$0xff]
    %v90 = vld [vmem:[#allocation5 + $0x48] sm:$0xff]
    %v91 = vld [vmem:[#allocation5 + $0x50] sm:$0xff]
    %v92 = vld [vmem:[#allocation5 + $0x58] sm:$0xff]
    %v93 = vld [vmem:[#allocation5 + $0x60] sm:$0xff]
    %v94 = vld [vmem:[#allocation5 + $0x68] sm:$0xff]
    %v95 = vld [vmem:[#allocation5 + $0x70] sm:$0xff]
    %v96 = vld [vmem:[#allocation5 + $0x78] sm:$0xff]
    %v97 = vld [vmem:[%s4] sm:$0x1]
    %v99 = vlaneseq
    %v100 = vshrl.u32 %v99, 7
    %v101 = vsub.s32 0, %v100
    %v102 = vrot.slane %v97, %v101
    %104 = vmatprep.subr.mxu0 0.0
    %105 = vmatpush1.msra.mxu0 %v96
    %106 = vmatprep.subr.mxu0 0.0
    %107 = vmatpush1.msra.mxu0 %v95
    %108 = vmatprep.subr.mxu0 0.0
    %109 = vmatpush1.msra.mxu0 %v94
    %110 = vmatprep.subr.mxu0 0.0
    %111 = vmatpush1.msra.mxu0 %v93
    %112 = vmatprep.subr.mxu0 0.0
    %113 = vmatpush1.msra.mxu0 %v92
    %114 = vmatprep.subr.mxu0 0.0
    %115 = vmatpush1.msra.mxu0 %v91
    %116 = vmatprep.subr.mxu0 0.0
    %117 = vmatpush1.msra.mxu0 %v90
    %118 = vmatprep.subr.mxu0 0.0
    %119 = vmatpush1.msra.mxu0 %v89
    %120 = vmatprep.subr.mxu0 0.0
    %121 = vmatpush1.msra.mxu0 %v88
    %122 = vmatprep.subr.mxu0 0.0
    %123 = vmatpush1.msra.mxu0 %v87
    %124 = vmatprep.subr.mxu0 0.0
    %125 = vmatpush1.msra.mxu0 %v86
    %126 = vmatprep.subr.mxu0 0.0
    %127 = vmatpush1.msra.mxu0 %v85
    %128 = vmatprep.subr.mxu0 0.0
    %129 = vmatpush1.msra.mxu0 %v84
    %130 = vmatprep.subr.mxu0 0.0
    %131 = vmatpush1.msra.mxu0 %v83
    %132 = vmatprep.subr.mxu0 0.0
    %133 = vmatpush1.msra.mxu0 %v82
    %134 = vmatprep.subr.mxu0 0.0
    %135 = vmatpush1.msra.mxu0 %v81
    %136 = vmatprep.subr.mxu0 0.0
    %137 = vmatpush2.msra.mxu0 0.0
    %138 = vmatprep.subr.mxu0 0.0
    %139 = vmatpush2.msra.mxu0 0.0
    %140 = vmatprep.subr.mxu0 0.0
    %141 = vmatpush2.msra.mxu0 0.0
    %142 = vmatprep.subr.mxu0 0.0
    %143 = vmatpush2.msra.mxu0 0.0
    %144 = vmatprep.subr.mxu0 0.0
    %145 = vmatpush2.msra.mxu0 0.0
    %146 = vmatprep.subr.mxu0 0.0
    %147 = vmatpush2.msra.mxu0 0.0
    %148 = vmatprep.subr.mxu0 0.0
    %149 = vmatpush2.msra.mxu0 0.0
    %150 = vmatprep.subr.mxu0 0.0
    %151 = vmatpush2.msra.mxu0 0.0
    %152 = vmatprep.subr.mxu0 0.0
    %153 = vmatpush2.msra.mxu0 0.0
    %154 = vmatprep.subr.mxu0 0.0
    %155 = vmatpush2.msra.mxu0 0.0
    %156 = vmatprep.subr.mxu0 0.0
    %157 = vmatpush2.msra.mxu0 0.0
    %158 = vmatprep.subr.mxu0 0.0
    %159 = vmatpush2.msra.mxu0 0.0
    %160 = vmatprep.subr.mxu0 0.0
    %161 = vmatpush2.msra.mxu0 0.0
    %162 = vmatprep.subr.mxu0 0.0
    %163 = vmatpush2.msra.mxu0 0.0
    %164 = vmatprep.subr.mxu0 0.0
    %165 = vmatpush2.msra.mxu0 0.0
    %166 = vmatprep.subr.mxu0 0.0
    %167 = vmatpush2.msra.mxu0 0.0
    %168 = vmatprep.mubr.f32.mxu0 0.0
    %169 = vmatmul.mubr.f32.gmra.mxu0 %v80
    %v170 = vpop.f32.mrf.mxu0
    %v171 = vadd.f32 %v102, %v170
    %v172 = vpop.f32.mrf.mxu0
    %173 = vdwg.mxu0
    %v174 = vmax.f32 %v171, 0.0
    %v175 = vld [vmem:[#allocation7] sm:$0xff]
    %v176 = vld [vmem:[#allocation7 + $0x8] sm:$0xff]
    %v177 = vld [vmem:[#allocation7 + $0x10] sm:$0xff]
    %v178 = vld [vmem:[#allocation7 + $0x18] sm:$0xff]
    %v179 = vld [vmem:[#allocation7 + $0x20] sm:$0xff]
    %v180 = vld [vmem:[#allocation7 + $0x28] sm:$0xff]
    %v181 = vld [vmem:[#allocation7 + $0x30] sm:$0xff]
    %v182 = vld [vmem:[#allocation7 + $0x38] sm:$0xff]
    %v183 = vld [vmem:[#allocation7 + $0x40] sm:$0xff]
    %v184 = vld [vmem:[#allocation7 + $0x48] sm:$0xff]
    %v185 = vld [vmem:[#allocation7 + $0x50] sm:$0xff]
    %v186 = vld [vmem:[#allocation7 + $0x58] sm:$0xff]
    %v187 = vld [vmem:[#allocation7 + $0x60] sm:$0xff]
    %v188 = vld [vmem:[#allocation7 + $0x68] sm:$0xff]
    %v189 = vld [vmem:[#allocation7 + $0x70] sm:$0xff]
    %v190 = vld [vmem:[#allocation7 + $0x78] sm:$0xff]
    %v191 = vld [vmem:[%s5] sm:$0x1]
    %v193 = vlaneseq
    %v194 = vshrl.u32 %v193, 7
    %v195 = vsub.s32 0, %v194
    %v196 = vrot.slane %v191, %v195
    %198 = vmatprep.subr.mxu0 0.0
    %199 = vmatpush1.msra.mxu0 %v190
    %200 = vmatprep.subr.mxu0 0.0
    %201 = vmatpush1.msra.mxu0 %v189
    %202 = vmatprep.subr.mxu0 0.0
    %203 = vmatpush1.msra.mxu0 %v188
    %204 = vmatprep.subr.mxu0 0.0
    %205 = vmatpush1.msra.mxu0 %v187
    %206 = vmatprep.subr.mxu0 0.0
    %207 = vmatpush1.msra.mxu0 %v186
    %208 = vmatprep.subr.mxu0 0.0
    %209 = vmatpush1.msra.mxu0 %v185
    %210 = vmatprep.subr.mxu0 0.0
    %211 = vmatpush1.msra.mxu0 %v184
    %212 = vmatprep.subr.mxu0 0.0
    %213 = vmatpush1.msra.mxu0 %v183
    %214 = vmatprep.subr.mxu0 0.0
    %215 = vmatpush1.msra.mxu0 %v182
    %216 = vmatprep.subr.mxu0 0.0
    %217 = vmatpush1.msra.mxu0 %v181
    %218 = vmatprep.subr.mxu0 0.0
    %219 = vmatpush1.msra.mxu0 %v180
    %220 = vmatprep.subr.mxu0 0.0
    %221 = vmatpush1.msra.mxu0 %v179
    %222 = vmatprep.subr.mxu0 0.0
    %223 = vmatpush1.msra.mxu0 %v178
    %224 = vmatprep.subr.mxu0 0.0
    %225 = vmatpush1.msra.mxu0 %v177
    %226 = vmatprep.subr.mxu0 0.0
    %227 = vmatpush1.msra.mxu0 %v176
    %228 = vmatprep.subr.mxu0 0.0
    %229 = vmatpush1.msra.mxu0 %v175
    %230 = vmatprep.subr.mxu0 0.0
    %231 = vmatpush2.msra.mxu0 0.0
    %232 = vmatprep.subr.mxu0 0.0
    %233 = vmatpush2.msra.mxu0 0.0
    %234 = vmatprep.subr.mxu0 0.0
    %235 = vmatpush2.msra.mxu0 0.0
    %236 = vmatprep.subr.mxu0 0.0
    %237 = vmatpush2.msra.mxu0 0.0
    %238 = vmatprep.subr.mxu0 0.0
    %239 = vmatpush2.msra.mxu0 0.0
    %240 = vmatprep.subr.mxu0 0.0
    %241 = vmatpush2.msra.mxu0 0.0
    %242 = vmatprep.subr.mxu0 0.0
    %243 = vmatpush2.msra.mxu0 0.0
    %244 = vmatprep.subr.mxu0 0.0
    %245 = vmatpush2.msra.mxu0 0.0
    %246 = vmatprep.subr.mxu0 0.0
    %247 = vmatpush2.msra.mxu0 0.0
    %248 = vmatprep.subr.mxu0 0.0
    %249 = vmatpush2.msra.mxu0 0.0
    %250 = vmatprep.subr.mxu0 0.0
    %251 = vmatpush2.msra.mxu0 0.0
    %252 = vmatprep.subr.mxu0 0.0
    %253 = vmatpush2.msra.mxu0 0.0
    %254 = vmatprep.subr.mxu0 0.0
    %255 = vmatpush2.msra.mxu0 0.0
    %256 = vmatprep.subr.mxu0 0.0
    %257 = vmatpush2.msra.mxu0 0.0
    %258 = vmatprep.subr.mxu0 0.0
    %259 = vmatpush2.msra.mxu0 0.0
    %260 = vmatprep.subr.mxu0 0.0
    %261 = vmatpush2.msra.mxu0 0.0
    %262 = vmatprep.mubr.f32.mxu0 0.0
    %263 = vmatmul.mubr.f32.gmra.mxu0 %v174
    %v264 = vpop.f32.mrf.mxu0
    %v265 = vadd.f32 %v196, %v264
    %v266 = vpop.f32.mrf.mxu0
    %267 = vdwg.mxu0
    %v268 = vmax.f32 %v265, 0.0
    %v269 = vld [vmem:[#allocation8] sm:$0xff]
    %v270 = vld [vmem:[#allocation8 + $0x8] sm:$0xff]
    %v271 = vld [vmem:[#allocation8 + $0x10] sm:$0xff]
    %v272 = vld [vmem:[#allocation8 + $0x18] sm:$0xff]
    %v273 = vld [vmem:[#allocation8 + $0x20] sm:$0xff]
    %v274 = vld [vmem:[#allocation8 + $0x28] sm:$0xff]
    %v275 = vld [vmem:[#allocation8 + $0x30] sm:$0xff]
    %v276 = vld [vmem:[#allocation8 + $0x38] sm:$0xff]
    %v277 = vld [vmem:[#allocation8 + $0x40] sm:$0xff]
    %v278 = vld [vmem:[#allocation8 + $0x48] sm:$0xff]
    %v279 = vld [vmem:[#allocation8 + $0x50] sm:$0xff]
    %v280 = vld [vmem:[#allocation8 + $0x58] sm:$0xff]
    %v281 = vld [vmem:[#allocation8 + $0x60] sm:$0xff]
    %v282 = vld [vmem:[#allocation8 + $0x68] sm:$0xff]
    %v283 = vld [vmem:[#allocation8 + $0x70] sm:$0xff]
    %v284 = vld [vmem:[#allocation8 + $0x78] sm:$0xff]
    %v285 = vld [vmem:[%s6] sm:$0x1]
    %v287 = vlaneseq
    %v288 = vshrl.u32 %v287, 7
    %v289 = vsub.s32 0, %v288
    %v290 = vrot.slane %v285, %v289
    %292 = vmatprep.subr.mxu0 0.0
    %293 = vmatpush1.msra.mxu0 %v284
    %294 = vmatprep.subr.mxu0 0.0
    %295 = vmatpush1.msra.mxu0 %v283
    %296 = vmatprep.subr.mxu0 0.0
    %297 = vmatpush1.msra.mxu0 %v282
    %298 = vmatprep.subr.mxu0 0.0
    %299 = vmatpush1.msra.mxu0 %v281
    %300 = vmatprep.subr.mxu0 0.0
    %301 = vmatpush1.msra.mxu0 %v280
    %302 = vmatprep.subr.mxu0 0.0
    %303 = vmatpush1.msra.mxu0 %v279
    %304 = vmatprep.subr.mxu0 0.0
    %305 = vmatpush1.msra.mxu0 %v278
    %306 = vmatprep.subr.mxu0 0.0
    %307 = vmatpush1.msra.mxu0 %v277
    %308 = vmatprep.subr.mxu0 0.0
    %309 = vmatpush1.msra.mxu0 %v276
    %310 = vmatprep.subr.mxu0 0.0
    %311 = vmatpush1.msra.mxu0 %v275
    %312 = vmatprep.subr.mxu0 0.0
    %313 = vmatpush1.msra.mxu0 %v274
    %314 = vmatprep.subr.mxu0 0.0
    %315 = vmatpush1.msra.mxu0 %v273
    %316 = vmatprep.subr.mxu0 0.0
    %317 = vmatpush1.msra.mxu0 %v272
    %318 = vmatprep.subr.mxu0 0.0
    %319 = vmatpush1.msra.mxu0 %v271
    %320 = vmatprep.subr.mxu0 0.0
    %321 = vmatpush1.msra.mxu0 %v270
    %322 = vmatprep.subr.mxu0 0.0
    %323 = vmatpush1.msra.mxu0 %v269
    %324 = vmatprep.subr.mxu0 0.0
    %325 = vmatpush2.msra.mxu0 0.0
    %326 = vmatprep.subr.mxu0 0.0
    %327 = vmatpush2.msra.mxu0 0.0
    %328 = vmatprep.subr.mxu0 0.0
    %329 = vmatpush2.msra.mxu0 0.0
    %330 = vmatprep.subr.mxu0 0.0
    %331 = vmatpush2.msra.mxu0 0.0
    %332 = vmatprep.subr.mxu0 0.0
    %333 = vmatpush2.msra.mxu0 0.0
    %334 = vmatprep.subr.mxu0 0.0
    %335 = vmatpush2.msra.mxu0 0.0
    %336 = vmatprep.subr.mxu0 0.0
    %337 = vmatpush2.msra.mxu0 0.0
    %338 = vmatprep.subr.mxu0 0.0
    %339 = vmatpush2.msra.mxu0 0.0
    %340 = vmatprep.subr.mxu0 0.0
    %341 = vmatpush2.msra.mxu0 0.0
    %342 = vmatprep.subr.mxu0 0.0
    %343 = vmatpush2.msra.mxu0 0.0
    %344 = vmatprep.subr.mxu0 0.0
    %345 = vmatpush2.msra.mxu0 0.0
    %346 = vmatprep.subr.mxu0 0.0
    %347 = vmatpush2.msra.mxu0 0.0
    %348 = vmatprep.subr.mxu0 0.0
    %349 = vmatpush2.msra.mxu0 0.0
    %350 = vmatprep.subr.mxu0 0.0
    %351 = vmatpush2.msra.mxu0 0.0
    %352 = vmatprep.subr.mxu0 0.0
    %353 = vmatpush2.msra.mxu0 0.0
    %354 = vmatprep.subr.mxu0 0.0
    %355 = vmatpush2.msra.mxu0 0.0
    %356 = vmatprep.mubr.f32.mxu0 0.0
    %357 = vmatmul.mubr.f32.gmra.mxu0 %v268
    %v358 = vpop.f32.mrf.mxu0
    %v359 = vadd.f32 %v290, %v358
    %v360 = vpop.f32.mrf.mxu0
    %361 = vdwg.mxu0
    %362 = vst [vmem:[#allocation10] sm:$0xff] %v359
    // Predicated region
    $region46: #{tpu_custom_call.1} parent=1 // pred_check
      _
    $region47: #{tpu_custom_call.1} parent=1 // pred_check_branch
      %364 = sbr.rel (0) target = $region49
    $region48: #{tpu_custom_call.1} parent=1 // pred_region
      %s366 = ssub.s32 128, 128
      %367 = vsyncadd [#allocation4], %s366
      %s369 = sshll.u32 [#allocation10], 4
      %s370 = int_to_ptr.vmem [resolvable:$true] %s369
      %372 = dma.vmem_to_hbm [thread:$0]  %s370, 128, %s7, [#allocation4]
    $region49: #{tpu_custom_call.1} parent=1 // pred_fallthru
      _
    // Predicated region
    $region50: #{tpu_custom_call.1} parent=1 // pred_check
      _
    $region51: #{tpu_custom_call.1} parent=1 // pred_check_branch
      %374 = sbr.rel (0) target = $region53
    $region52: #{tpu_custom_call.1} parent=1 // pred_region
      %375 = dma.done [#allocation4], 128
    $region53: #{tpu_custom_call.1} parent=1 // pred_fallthru
      _
    %376 = vsyncpa [#allocation3], 1
    %377 = vsyncpa [#allocation6], 1
    %378 = vsyncpa [#allocation9], 1
    %379 = vsyncpa [#allocation4], 1

</llo_original>
